<compile_context>
chip_gen: v7x
topology: tpu7x:2x2x1
jax: 0.10.0
libtpu: 0.0.40
codegen_flags: <defaults>
</compile_context>

<pallas_src>
import functools

import jax
import jax.numpy as jnp
from jax.experimental import pallas as pl
from jax.experimental.pallas import tpu as pltpu

SELU_ALPHA = 1.6732632423543772
SELU_SCALE = 1.0507009873554805


def _lfm_kernel(bias_ref, uf_ref, if_ref, out_ref):
    # uf_ref / if_ref: (R, TILE_B) f32 ; bias_ref / out_ref: (1, TILE_B) f32
    x = uf_ref[...] * if_ref[...]
    # SELU(x) = scale * (x              if x > 0
    #                    alpha*(e^x-1)  otherwise)
    # exp(min(x, 0)) keeps the inactive branch from overflowing.
    neg = SELU_ALPHA * (jnp.exp(jnp.minimum(x, 0.0)) - 1.0)
    selu = SELU_SCALE * jnp.where(x > 0.0, x, neg)
    # rank reduction across sublanes -> lane-dense (1, TILE_B) result.
    out_ref[...] = bias_ref[...] + jnp.sum(selu, axis=0, keepdims=True)


@functools.partial(jax.jit, static_argnames=("tile_b",))
def lfm_forward(mu, user_bias, item_bias, P, Q, user_ids, item_ids,
                tile_b=1024):
    """Equivalent of LFM.forward(user_ids, item_ids). Returns f32[B]."""
    B = user_ids.shape[0]
    R = P.shape[1]

    # One grid step for small batches; never shrink the lane dim below 128.
    # tile_b stays a multiple of 128 so every block is lane-aligned.
    tile_b = max(128, min(tile_b, 128 * pl.cdiv(B, 128)))
    Bp = tile_b * pl.cdiv(B, tile_b)
    pad = Bp - B

    # Glue (pure indexing / layout plumbing): merged lane-dense bias stream
    # and factors gathered straight into the (R, B) kernel layout.
    # TODO(synk): fuse these gathers into the kernel (scalar-prefetched ids +
    # manual DMA row gather from P/Q kept in pl.ANY) to avoid the HBM
    # round-trip of the gathered factors for production-sized batches.
    bias = mu[0] + user_bias[user_ids] + item_bias[item_ids]        # (B,)
    uf_t = jnp.take(P, user_ids, axis=0).T                          # (R, B)
    if_t = jnp.take(Q, item_ids, axis=0).T                          # (R, B)

    if pad:
        # Zero padding is safe: 0*0 -> SELU(0)=0 -> sum 0, and the padded
        # columns are sliced off below.
        bias = jnp.pad(bias, (0, pad))
        uf_t = jnp.pad(uf_t, ((0, 0), (0, pad)))
        if_t = jnp.pad(if_t, ((0, 0), (0, pad)))
    bias2d = bias[None, :]                                          # (1, Bp)

    out = pl.pallas_call(
        _lfm_kernel,
        out_shape=jax.ShapeDtypeStruct((1, Bp), jnp.float32),
        grid=(Bp // tile_b,),
        in_specs=[
            pl.BlockSpec((1, tile_b), lambda i: (0, i)),   # merged bias
            pl.BlockSpec((R, tile_b), lambda i: (0, i)),   # user factors (R, TILE_B)
            pl.BlockSpec((R, tile_b), lambda i: (0, i)),   # item factors (R, TILE_B)
        ],
        out_specs=pl.BlockSpec((1, tile_b), lambda i: (0, i)),
        compiler_params=pltpu.CompilerParams(
            dimension_semantics=("parallel",)),
    )(bias2d, uf_t, if_t)
    return out[0, :B]


def init_params(key, n_users, n_items, n_rank):
    """Deterministic param init mirroring the PyTorch __init__ shapes.

    kaiming_normal_ (fan_in mode, leaky_relu a=0) on an (N, R) tensor:
    std = sqrt(2 / fan_in) with fan_in = R.
    """
    kp, kq = jax.random.split(key)
    std = (2.0 / n_rank) ** 0.5
    P = std * jax.random.normal(kp, (n_users + 1, n_rank), dtype=jnp.float32)
    Q = std * jax.random.normal(kq, (n_items + 1, n_rank), dtype=jnp.float32)
    mu = jnp.zeros((1,), dtype=jnp.float32)
    user_bias = jnp.zeros((n_users + 1,), dtype=jnp.float32)
    item_bias = jnp.zeros((n_items + 1,), dtype=jnp.float32)
    return mu, user_bias, item_bias, P, Q


def _reference(mu, user_bias, item_bias, P, Q, user_ids, item_ids):
    uf = P[user_ids]
    itf = Q[item_ids]
    inter = jnp.sum(jax.nn.selu(uf * itf), axis=1)
    return mu[0] + user_bias[user_ids] + item_bias[item_ids] + inter


if __name__ == "__main__":
    n_users, n_items, n_rank = 16, 24, 32
    batch = 8

    key = jax.random.PRNGKey(0)
    k_param, k_u, k_i, k_bias_u, k_bias_i = jax.random.split(key, 5)
    mu, user_bias, item_bias, P, Q = init_params(k_param, n_users, n_items, n_rank)
    # give the biases some non-zero values so the bias-add path is exercised
    user_bias = 0.1 * jax.random.normal(k_bias_u, user_bias.shape, dtype=jnp.float32)
    item_bias = 0.1 * jax.random.normal(k_bias_i, item_bias.shape, dtype=jnp.float32)
    mu = jnp.array([3.5], dtype=jnp.float32)

    user_ids = jax.random.randint(k_u, (batch,), 0, n_users + 1)
    item_ids = jax.random.randint(k_i, (batch,), 0, n_items + 1)

    pred = lfm_forward(mu, user_bias, item_bias, P, Q, user_ids, item_ids)
    pred = jax.block_until_ready(pred)

    ref = _reference(mu, user_bias, item_bias, P, Q, user_ids, item_ids)
    assert pred.shape == (batch,)
    assert jnp.allclose(pred, ref, atol=1e-5, rtol=1e-5), (pred, ref)

    print("KERNEL_OK")
</pallas_src>

<mosaic_0001>
module attributes {stable_mosaic.version = 11 : i64} {
  func.func @_lfm_kernel(%arg0: i32, %arg1: memref<1x128xf32, #tpu.memory_space<vmem>>, %arg2: memref<32x128xf32, #tpu.memory_space<vmem>>, %arg3: memref<32x128xf32, #tpu.memory_space<vmem>>, %arg4: memref<1x128xf32, #tpu.memory_space<vmem>>) attributes {dimension_semantics = [#tpu.dimension_semantics<parallel>], iteration_bounds = array<i64: 1>, scalar_prefetch = 0 : i64, scratch_operands = 0 : i64, tpu.core_type = #tpu.core_type<tc>, window_params = [{transform_indices = @transform_0, window_bounds = array<i64: 1, 128>}, {transform_indices = @transform_1, window_bounds = array<i64: 32, 128>}, {transform_indices = @transform_2, window_bounds = array<i64: 32, 128>}, {transform_indices = @transform_3, window_bounds = array<i64: 1, 128>}]} {
    %c0 = arith.constant 0 : index
    %c0_0 = arith.constant 0 : index
    %0 = vector.load %arg2[%c0, %c0_0] : memref<32x128xf32, #tpu.memory_space<vmem>>, vector<32x128xf32>
    %c0_1 = arith.constant 0 : index
    %c0_2 = arith.constant 0 : index
    %1 = vector.load %arg3[%c0_1, %c0_2] : memref<32x128xf32, #tpu.memory_space<vmem>>, vector<32x128xf32>
    %2 = arith.mulf %0, %1 : vector<32x128xf32>
    %cst = arith.constant 0.000000e+00 : f32
    %3 = vector.broadcast %cst : f32 to vector<32x128xf32>
    %4 = arith.minimumf %2, %3 : vector<32x128xf32>
    %5 = math.exp %4 : vector<32x128xf32>
    %cst_3 = arith.constant 1.000000e+00 : f32
    %6 = vector.broadcast %cst_3 : f32 to vector<32x128xf32>
    %7 = arith.subf %5, %6 : vector<32x128xf32>
    %cst_4 = arith.constant 1.67326319 : f32
    %8 = vector.broadcast %cst_4 : f32 to vector<32x128xf32>
    %9 = arith.mulf %8, %7 : vector<32x128xf32>
    %cst_5 = arith.constant 0.000000e+00 : f32
    %10 = vector.broadcast %cst_5 : f32 to vector<32x128xf32>
    %11 = arith.cmpf ogt, %2, %10 : vector<32x128xf32>
    %12 = arith.select %11, %2, %9 : vector<32x128xi1>, vector<32x128xf32>
    %cst_6 = arith.constant 1.05070102 : f32
    %13 = vector.broadcast %cst_6 : f32 to vector<32x128xf32>
    %14 = arith.mulf %13, %12 : vector<32x128xf32>
    %c0_7 = arith.constant 0 : index
    %c0_8 = arith.constant 0 : index
    %15 = vector.load %arg1[%c0_7, %c0_8] : memref<1x128xf32, #tpu.memory_space<vmem>>, vector<1x128xf32>
    %cst_9 = arith.constant dense<0.000000e+00> : vector<128xf32>
    %16 = vector.multi_reduction <add>, %14, %cst_9 [0] : vector<32x128xf32> to vector<128xf32>
    %17 = vector.shape_cast %16 : vector<128xf32> to vector<1x128xf32>
    %18 = arith.addf %15, %17 : vector<1x128xf32>
    %c0_10 = arith.constant 0 : index
    %c0_11 = arith.constant 0 : index
    %19 = vector.load %arg4[%c0_10, %c0_11] : memref<1x128xf32, #tpu.memory_space<vmem>>, vector<1x128xf32>
    tpu.vector_store %arg4[%c0_10, %c0_11], %18 {strides = array<i32>} : memref<1x128xf32, #tpu.memory_space<vmem>>, vector<1x128xf32>,
    return
  }
  func.func @transform_0(%arg0: i32) -> (i32, i32) {
    %c0_i32 = arith.constant 0 : i32
    %c0_i32_0 = arith.constant 0 : i32
    return %c0_i32, %arg0 : i32, i32
  }
  func.func @transform_1(%arg0: i32) -> (i32, i32) {
    %c0_i32 = arith.constant 0 : i32
    %c0_i32_0 = arith.constant 0 : i32
    return %c0_i32, %arg0 : i32, i32
  }
  func.func @transform_2(%arg0: i32) -> (i32, i32) {
    %c0_i32 = arith.constant 0 : i32
    %c0_i32_0 = arith.constant 0 : i32
    return %c0_i32, %arg0 : i32, i32
  }
  func.func @transform_3(%arg0: i32) -> (i32, i32) {
    %c0_i32 = arith.constant 0 : i32
    %c0_i32_0 = arith.constant 0 : i32
    return %c0_i32, %arg0 : i32, i32
  }
}

</mosaic_0001>

<llo_original>
// kernel: lfm_forward.1
$region0: #{lfm_forward.1}
  #allocation0 [shape = 'u32[]', space=smem, size = 0x4, offset = 0x4, fixed_abs, tag = 'smem constant byte address 0x4 - core index']
  #allocation1 [shape = 'u32[144,128]{1,0:T(1,128)}', space=vmem, size = 0x12000, scoped, tag = 'internal scratch']
  %s0 = inlined_call_operand.vmem [shape: f32[1,128], index: 0, kind: input, shape index: {}]
  %s1 = inlined_call_operand.vmem [shape: f32[32,128], index: 1, kind: input, shape index: {}]
  %s2 = inlined_call_operand.vmem [shape: f32[32,128], index: 2, kind: input, shape index: {}]
  %s3 = inlined_call_operand.vmem [shape: f32[1,128], index: 3, kind: output, shape index: {}]
  %s4 = sld [smem:[#allocation0]]
  $region22: #{lfm_forward.1} parent=0
    _
  %s6 = ssub.s32 1, %s4
  %s7 = scalar_select 0, %s6, %s4
  // Predicated region
  $region2: #{lfm_forward.1} parent=0 // pred_check
    _
  $region3: #{lfm_forward.1} parent=0 // pred_check_branch
    %9 = sbr.rel (0) target = $region5
  $region4: #{lfm_forward.1} parent=0 // pred_region
    _
  $region5: #{lfm_forward.1} parent=0 // pred_fallthru
    _
  // Predicated region
  $region6: #{lfm_forward.1} parent=0 // pred_check
    _
  $region7: #{lfm_forward.1} parent=0 // pred_check_branch
    %11 = sbr.rel (0) target = $region9
  $region8: #{lfm_forward.1} parent=0 // pred_region
    _
  $region9: #{lfm_forward.1} parent=0 // pred_fallthru
    _
  // Predicated region
  $region10: #{lfm_forward.1} parent=0 // pred_check
    _
  $region11: #{lfm_forward.1} parent=0 // pred_check_branch
    %13 = sbr.rel (0) target = $region13
  $region12: #{lfm_forward.1} parent=0 // pred_region
    _
  $region13: #{lfm_forward.1} parent=0 // pred_fallthru
    _
  %v14 = vld [vmem:[%s1] sm:$0xff]
  %v15 = vld [vmem:[%s1 + $0x8] sm:$0xff]
  %v16 = vld [vmem:[%s1 + $0x10] sm:$0xff]
  %v17 = vld [vmem:[%s1 + $0x18] sm:$0xff]
  %v18 = vld [vmem:[%s2] sm:$0xff]
  %v19 = vld [vmem:[%s2 + $0x8] sm:$0xff]
  %v20 = vld [vmem:[%s2 + $0x10] sm:$0xff]
  %v21 = vld [vmem:[%s2 + $0x18] sm:$0xff]
  %v22 = vmul.f32 %v14, %v18
  %v23 = vmul.f32 %v15, %v19
  %v24 = vmul.f32 %v16, %v20
  %v25 = vmul.f32 %v17, %v21
  %v26 = vmin.f32 %v22, 0.0
  %v27 = vmin.f32 %v23, 0.0
  %v28 = vmin.f32 %v24, 0.0
  %v29 = vmin.f32 %v25, 0.0
  %v30 = vmul.f32 %v26, 1.442695
  %v31 = vpow.pop %v30
  %v32 = vmul.f32 %v27, 1.442695
  %v33 = vpow.pop %v32
  %v34 = vmul.f32 %v28, 1.442695
  %v35 = vpow.pop %v34
  %v36 = vmul.f32 %v29, 1.442695
  %v37 = vpow.pop %v36
  %v38 = vsub.f32 %v31, 1.0
  %v39 = vsub.f32 %v33, 1.0
  %v40 = vsub.f32 %v35, 1.0
  %v41 = vsub.f32 %v37, 1.0
  %v42 = vmul.f32 %v38, 1.6732632
  %v43 = vmul.f32 %v39, 1.6732632
  %v44 = vmul.f32 %v40, 1.6732632
  %v45 = vmul.f32 %v41, 1.6732632
  %vm46 = vcmp.gt.f32.partialorder %v22, 0.0
  %vm47 = vcmp.gt.f32.partialorder %v23, 0.0
  %vm48 = vcmp.gt.f32.partialorder %v24, 0.0
  %vm49 = vcmp.gt.f32.partialorder %v25, 0.0
  %v50 = vsel %vm46, %v22, %v42
  %v51 = vsel %vm47, %v23, %v43
  %v52 = vsel %vm48, %v24, %v44
  %v53 = vsel %vm49, %v25, %v45
  %v54 = vmul.f32 %v50, 1.050701
  %v55 = vmul.f32 %v51, 1.050701
  %v56 = vmul.f32 %v52, 1.050701
  %v57 = vmul.f32 %v53, 1.050701
  %v58 = vld [vmem:[%s0] sm:$0x1]
  %v59 = vadd.f32 %v54, %v55
  %v60 = vadd.f32 %v59, %v56
  %v61 = vadd.f32 %v60, %v57
  %v62 = vrot.slane %v61, 4
  %v63 = vadd.f32 %v61, %v62
  %v64 = vrot.slane %v63, 2
  %v65 = vadd.f32 %v63, %v64
  %v66 = vrot.slane %v65, 1
  %v67 = vadd.f32 %v65, %v66
  %v68 = vadd.f32 %v58, %v67
  %69 = vst [vmem:[%s3] sm:$0x1] %v68
  // Predicated region
  $region14: #{lfm_forward.1} parent=0 // pred_check
    _
  $region15: #{lfm_forward.1} parent=0 // pred_check_branch
    %71 = sbr.rel (0) target = $region17
  $region16: #{lfm_forward.1} parent=0 // pred_region
    _
  $region17: #{lfm_forward.1} parent=0 // pred_fallthru
    _
  // Predicated region
  $region18: #{lfm_forward.1} parent=0 // pred_check
    _
  $region19: #{lfm_forward.1} parent=0 // pred_check_branch
    %73 = sbr.rel (0) target = $region21
  $region20: #{lfm_forward.1} parent=0 // pred_region
    _
  $region21: #{lfm_forward.1} parent=0 // pred_fallthru
    _

</llo_original>
